<compile_context>
chip_gen: v6e
topology: v6e:2x2x1
jax: 0.10.0
libtpu: 0.0.40
codegen_flags: <defaults>
</compile_context>

<pallas_src>
import functools
import math

import jax
import jax.numpy as jnp
import numpy as np
from jax import lax
from jax.experimental import pallas as pl
from jax.experimental.pallas import tpu as pltpu

NEG_INF = -1e30  # big-negative fill; exp2(NEG_INF - finite) underflows to 0


@functools.lru_cache(maxsize=None)
def _vmem_limit_bytes() -> int:
    """Per-generation scoped-VMEM limit (~40 MiB on v7x, ~96 MiB on v5e/v6e)."""
    try:
        cap = int(pltpu.get_tpu_info().vmem_capacity_bytes)
    except Exception:
        cap = 128 * 1024 * 1024
    return 40 * 1024 * 1024 if cap <= 80 * 1024 * 1024 else 96 * 1024 * 1024


# ---------------------------------------------------------------------------
# Linear (x @ W + b) kernel, bf16 MXU operands, f32 accumulation.
# ---------------------------------------------------------------------------
def _linear_kernel(x_ref, w_ref, b_ref, o_ref):
    x = x_ref[...].astype(jnp.bfloat16)          # no-op if already bf16
    acc = jnp.dot(x, w_ref[...], preferred_element_type=jnp.float32)
    o_ref[...] = (acc + b_ref[...]).astype(o_ref.dtype)


def _pick_row_tile(M, block_rows):
    tm = min(block_rows, M)
    if M % tm != 0:
        tm = math.gcd(M, tm)
    if tm < M and tm % 8 != 0:
        return M                        # keep sublane alignment
    if M // tm < 2 and tm % 16 == 0:
        tm //= 2                        # >= 2 row tiles -> both v7x TCs get work
    return tm


def _pick_col_tile(N, K):
    """N tile so the double-buffered (K, tn) bf16 weight slab stays small."""
    if N <= 1024:
        return N                        # small enough to keep fully resident
    budget_elems = (8 * 1024 * 1024) // (2 * K)      # <= 8 MiB bf16 per buffer
    tn = min(N, max(128, (budget_elems // 128) * 128))
    if tn >= N:
        return N
    while tn >= 128 and N % tn != 0:
        tn -= 128
    return tn if tn >= 128 else N


def _linear(x, w_bf16, b_f32, *, out_dtype, block_rows=512):
    """x: (M, K); w_bf16: (K, N) bf16; b_f32: (1, N) f32 -> (M, N) out_dtype."""
    M, K = x.shape
    _, N = w_bf16.shape
    tm = _pick_row_tile(M, block_rows)
    tn = _pick_col_tile(N, K)
    assert M % tm == 0 and N % tn == 0

    flops = 2 * M * K * N
    w_streams = (M // tm) if tn < N else 1
    bytes_accessed = (M * K * x.dtype.itemsize + K * N * 2 * w_streams
                      + N * 4 + M * N * jnp.dtype(out_dtype).itemsize)

    return pl.pallas_call(
        _linear_kernel,
        out_shape=jax.ShapeDtypeStruct((M, N), out_dtype),
        grid=(M // tm, N // tn),
        in_specs=[
            pl.BlockSpec((tm, K), lambda i, j: (i, 0)),
            pl.BlockSpec((K, tn), lambda i, j: (0, j)),
            pl.BlockSpec((1, tn), lambda i, j: (0, j)),
        ],
        out_specs=pl.BlockSpec((tm, tn), lambda i, j: (i, j)),
        compiler_params=pltpu.CompilerParams(
            dimension_semantics=("parallel", "parallel"),
            vmem_limit_bytes=_vmem_limit_bytes()),
        cost_estimate=pl.CostEstimate(
            flops=flops, transcendentals=0, bytes_accessed=bytes_accessed),
    )(x, w_bf16, b_f32)


# ---------------------------------------------------------------------------
# Flash attention (causal) kernel: grid (batch, head, q_tile, kv_tile).
# Scores arrive pre-scaled by log2(e)/sqrt(dh) (folded into Wq), so the
# online softmax runs in base 2 (exp2) and needs no per-step q rescale.
# ---------------------------------------------------------------------------
def _flash_attention_kernel(q_ref, k_ref, v_ref, o_ref,
                            m_ref, l_ref, acc_ref, *, tq, tk):
    qi = pl.program_id(2)
    ki = pl.program_id(3)

    first_q = qi * tq
    first_k = ki * tk
    needed = first_k <= first_q + (tq - 1)        # tile intersects causal region
    interior = first_k + (tk - 1) <= first_q      # fully below the diagonal

    @pl.when(ki == 0)
    def _init():
        m_ref[...] = jnp.full(m_ref.shape, NEG_INF, dtype=jnp.float32)
        l_ref[...] = jnp.zeros(l_ref.shape, dtype=jnp.float32)
        acc_ref[...] = jnp.zeros(acc_ref.shape, dtype=jnp.float32)

    def update(masked):
        q = q_ref[0, 0]                                               # (tq, dh)
        k = k_ref[0, 0]
        v = v_ref[0, 0]
        # scores = q @ k^T via dot_general (no explicit K transpose), f32 acc.
        s = lax.dot_general(q, k, (((1,), (1,)), ((), ())),
                            preferred_element_type=jnp.float32)       # (tq, tk)
        if masked:   # only the diagonal tiles pay for iota/compare/select
            q_pos = first_q + lax.broadcasted_iota(jnp.int32, (tq, tk), 0)
            k_pos = first_k + lax.broadcasted_iota(jnp.int32, (tq, tk), 1)
            s = jnp.where(q_pos >= k_pos, s, NEG_INF)

        m_prev = m_ref[...]                                           # (tq,128)
        m_new = jnp.maximum(m_prev, jnp.max(s, axis=-1, keepdims=True))
        alpha = jnp.exp2(m_prev - m_new)                              # (tq,128)
        p = jnp.exp2(s - m_new[:, :1])                                # (tq, tk)

        l_ref[...] = alpha * l_ref[...] + jnp.sum(p, axis=-1, keepdims=True)
        acc_ref[...] = alpha[:, :1] * acc_ref[...] + jnp.dot(
            p.astype(jnp.bfloat16), v, preferred_element_type=jnp.float32)
        m_ref[...] = m_new

    @pl.when(interior)
    def _interior():
        update(masked=False)

    @pl.when(jnp.logical_and(needed, jnp.logical_not(interior)))
    def _diagonal():
        update(masked=True)

    @pl.when(ki == pl.num_programs(3) - 1)
    def _finalize():
        inv_l = pl.reciprocal(l_ref[...][:, :1], approx=True)         # (tq, 1)
        o_ref[0, 0] = (acc_ref[...] * inv_l).astype(o_ref.dtype)


def _flash_attention(q, k, v, *, block_q=512, block_k=256):
    """q, k, v: (B, num_heads, S, dh) bf16 (q pre-scaled) -> same shape bf16."""
    B, NH, S, DH = q.shape
    tq = min(block_q, S)
    tk = min(block_k, S)
    assert S % tq == 0 and S % tk == 0
    nq, nk = S // tq, S // tk

    kernel = functools.partial(_flash_attention_kernel, tq=tq, tk=tk)

    def q_map(b, h, qi, ki):
        return (b, h, qi, 0)

    def kv_map(b, h, qi, ki):
        # Clamp to the causal diagonal: skipped (above-diagonal) steps return
        # the same block index, so no K/V DMA is issued for them.
        return (b, h, jnp.minimum(ki, (qi * tq + tq - 1) // tk), 0)

    # Causal: matmul flops halved; K/V re-read ~nq/2 times each.
    flops = 2 * B * NH * S * S * DH
    transcendentals = B * NH * S * S // 2
    bytes_accessed = (2 * B * NH * S * DH * q.dtype.itemsize            # Q + O
                      + 2 * B * NH * S * DH * q.dtype.itemsize
                      * max(1, (nq + 1) // 2))                           # K + V

    grid_spec = pltpu.PrefetchScalarGridSpec(
        num_scalar_prefetch=0,
        grid=(B, NH, nq, nk),
        in_specs=[
            pl.BlockSpec((1, 1, tq, DH), q_map),
            pl.BlockSpec((1, 1, tk, DH), kv_map),
            pl.BlockSpec((1, 1, tk, DH), kv_map),
        ],
        out_specs=pl.BlockSpec((1, 1, tq, DH), q_map),
        scratch_shapes=[
            pltpu.VMEM((tq, 128), jnp.float32),   # running max (lane-replicated)
            pltpu.VMEM((tq, 128), jnp.float32),   # running denom (lane-replicated)
            pltpu.VMEM((tq, DH), jnp.float32),    # running accumulator
        ],
    )

    return pl.pallas_call(
        kernel,
        out_shape=jax.ShapeDtypeStruct((B, NH, S, DH), q.dtype),
        grid_spec=grid_spec,
        compiler_params=pltpu.CompilerParams(
            dimension_semantics=("parallel", "parallel", "parallel", "arbitrary"),
            vmem_limit_bytes=_vmem_limit_bytes()),
        cost_estimate=pl.CostEstimate(
            flops=flops, transcendentals=transcendentals,
            bytes_accessed=bytes_accessed),
    )(q, k, v)


# ---------------------------------------------------------------------------
# Full SelfAttention.forward (causal, no cache, eval mode).
# ---------------------------------------------------------------------------
def self_attention(x, params, *, num_heads: int):
    """x: (B, S, H) f32. params: wq,bq,wk,bk,wv,bv,wo,bo in PyTorch (out,in)."""
    B, S, H = x.shape
    assert H % num_heads == 0
    dh = H // num_heads
    bf16 = jnp.bfloat16

    # Fold 1/sqrt(dh) and log2(e) (exp2 trick) into the query projection so the
    # flash kernel never rescales q per step; the online softmax uses exp2.
    qk_scale = math.log2(math.e) / math.sqrt(dh)

    # Fuse the three separate Linear layers into one (H, 3H) weight in (in,out)
    # layout; weights pre-cast to bf16 (halves weight DMA bytes), biases f32.
    w_qkv = jnp.concatenate(
        [params["wq"].T * qk_scale, params["wk"].T, params["wv"].T],
        axis=1).astype(bf16)
    b_qkv = jnp.concatenate(
        [params["bq"] * qk_scale, params["bk"], params["bv"]]).reshape(1, 3 * H)
    b_qkv = b_qkv.astype(jnp.float32)
    w_o = params["wo"].T.astype(bf16)
    b_o = params["bo"].reshape(1, H).astype(jnp.float32)

    # 1) fused QKV projection.
    x2d = x.reshape(B * S, H)
    qkv = _linear(x2d, w_qkv, b_qkv, out_dtype=bf16)          # (B*S, 3H) bf16
    q, k, v = jnp.split(qkv, 3, axis=-1)

    # split_heads: (B*S, H) -> (B, num_heads, S, dh)  (wrapper plumbing; see TODO)
    def to_heads(t):
        return t.reshape(B, S, num_heads, dh).transpose(0, 2, 1, 3)

    q, k, v = to_heads(q), to_heads(k), to_heads(v)

    # 2) causal flash attention.
    attn = _flash_attention(q, k, v)                          # (B, nh, S, dh)

    # combine_heads: (B, nh, S, dh) -> (B*S, H)
    attn2d = attn.transpose(0, 2, 1, 3).reshape(B * S, H)

    # 3) output projection.
    out = _linear(attn2d, w_o, b_o, out_dtype=x.dtype)        # (B*S, H)
    return out.reshape(B, S, H)


# ---------------------------------------------------------------------------
# Pure-JAX f32 reference mirroring the PyTorch forward (eval mode).
# ---------------------------------------------------------------------------
def self_attention_reference(x, params, *, num_heads: int):
    B, S, H = x.shape
    dh = H // num_heads

    def lin(inp, w, b):  # PyTorch Linear: x @ W.T + b
        return inp @ w.T + b

    q = lin(x, params["wq"], params["bq"])
    k = lin(x, params["wk"], params["bk"])
    v = lin(x, params["wv"], params["bv"])

    def split(t):  # (B,S,H) -> (B,nh,S,dh)
        return t.reshape(B, S, num_heads, dh).transpose(0, 2, 1, 3)

    q, k, v = split(q), split(k), split(v)
    scores = jnp.einsum("bhqd,bhkd->bhqk", q, k) / math.sqrt(dh)
    causal = jnp.tril(jnp.ones((S, S), dtype=bool))[None, None]
    scores = jnp.where(causal, scores, jnp.finfo(x.dtype).min)
    weights = jax.nn.softmax(scores, axis=-1)
    attn = jnp.einsum("bhqk,bhkd->bhqd", weights, v)
    attn = attn.transpose(0, 2, 1, 3).reshape(B, S, H)  # combine_heads
    return lin(attn, params["wo"], params["bo"])


if __name__ == "__main__":
    B, S, H, NUM_HEADS = 2, 8, 32, 4

    key = jax.random.PRNGKey(0)
    keys = jax.random.split(key, 9)
    init = lambda k, shape: (0.02 * jax.random.normal(k, shape)).astype(jnp.float32)

    params = {
        "wq": init(keys[0], (H, H)), "bq": init(keys[1], (H,)),
        "wk": init(keys[2], (H, H)), "bk": init(keys[3], (H,)),
        "wv": init(keys[4], (H, H)), "bv": init(keys[5], (H,)),
        "wo": init(keys[6], (H, H)), "bo": init(keys[7], (H,)),
    }
    x = jax.random.normal(keys[8], (B, S, H), dtype=jnp.float32)

    out = self_attention(x, params, num_heads=NUM_HEADS)
    out = jax.block_until_ready(out)

    ref = jax.block_until_ready(
        self_attention_reference(x, params, num_heads=NUM_HEADS))
    # Kernels use bf16 MXU operands with f32 accumulation (per perf guidance),
    # so tolerance is set to bf16 level vs. the pure-f32 reference.
    np.testing.assert_allclose(np.asarray(out), np.asarray(ref),
                               rtol=5e-2, atol=1e-2)
    print("KERNEL_OK")
</pallas_src>

<mosaic_0001>
module attributes {stable_mosaic.version = 11 : i64} {
  func.func @_linear_kernel(%arg0: i32, %arg1: i32, %arg2: memref<8x32xf32, #tpu.memory_space<vmem>>, %arg3: memref<32x96xbf16, #tpu.memory_space<vmem>>, %arg4: memref<1x96xf32, #tpu.memory_space<vmem>>, %arg5: memref<8x96xbf16, #tpu.memory_space<vmem>>) attributes {dimension_semantics = [#tpu.dimension_semantics<parallel>, #tpu.dimension_semantics<parallel>], iteration_bounds = array<i64: 2, 1>, scalar_prefetch = 0 : i64, scratch_operands = 0 : i64, tpu.core_type = #tpu.core_type<tc>, window_params = [{transform_indices = @transform_0, window_bounds = array<i64: 8, 32>}, {transform_indices = @transform_1, window_bounds = array<i64: 32, 96>}, {transform_indices = @transform_2, window_bounds = array<i64: 1, 96>}, {transform_indices = @transform_3, window_bounds = array<i64: 8, 96>}]} {
    %c0 = arith.constant 0 : index
    %c0_0 = arith.constant 0 : index
    %0 = vector.load %arg2[%c0, %c0_0] : memref<8x32xf32, #tpu.memory_space<vmem>>, vector<8x32xf32>
    %1 = arith.truncf %0 : vector<8x32xf32> to vector<8x32xbf16>
    %c0_1 = arith.constant 0 : index
    %c0_2 = arith.constant 0 : index
    %2 = vector.load %arg3[%c0_1, %c0_2] : memref<32x96xbf16, #tpu.memory_space<vmem>>, vector<32x96xbf16>
    %cst = arith.constant dense<0.000000e+00> : vector<8x96xf32>
    %3 = tpu.matmul %1, %2, %cst {dimension_numbers = #tpu.dot_dimension_numbers<[1], [0], [0], [1], [0, 0, 1, 1], [], []>} : vector<8x32xbf16>, vector<32x96xbf16>, vector<8x96xf32> -> vector<8x96xf32>
    %c0_3 = arith.constant 0 : index
    %c0_4 = arith.constant 0 : index
    %4 = vector.load %arg4[%c0_3, %c0_4] : memref<1x96xf32, #tpu.memory_space<vmem>>, vector<1x96xf32>
    %5 = vector.broadcast %4 : vector<1x96xf32> to vector<8x96xf32>
    %6 = arith.addf %3, %5 : vector<8x96xf32>
    %7 = arith.truncf %6 : vector<8x96xf32> to vector<8x96xbf16>
    %c0_5 = arith.constant 0 : index
    %c0_6 = arith.constant 0 : index
    %8 = vector.load %arg5[%c0_5, %c0_6] : memref<8x96xbf16, #tpu.memory_space<vmem>>, vector<8x96xbf16>
    tpu.vector_store %arg5[%c0_5, %c0_6], %7 {strides = array<i32>} : memref<8x96xbf16, #tpu.memory_space<vmem>>, vector<8x96xbf16>,
    return
  }
  func.func @transform_0(%arg0: i32, %arg1: i32) -> (i32, i32) {
    %c0_i32 = arith.constant 0 : i32
    %c0_i32_0 = arith.constant 0 : i32
    return %arg0, %c0_i32 : i32, i32
  }
  func.func @transform_1(%arg0: i32, %arg1: i32) -> (i32, i32) {
    %c0_i32 = arith.constant 0 : i32
    %c0_i32_0 = arith.constant 0 : i32
    return %c0_i32, %arg1 : i32, i32
  }
  func.func @transform_2(%arg0: i32, %arg1: i32) -> (i32, i32) {
    %c0_i32 = arith.constant 0 : i32
    %c0_i32_0 = arith.constant 0 : i32
    return %c0_i32, %arg1 : i32, i32
  }
  func.func @transform_3(%arg0: i32, %arg1: i32) -> (i32, i32) {
    %c0_i32 = arith.constant 0 : i32
    return %arg0, %arg1 : i32, i32
  }
}

</mosaic_0001>

<llo_original>
// kernel: tpu_custom_call.1
$region0: #{tpu_custom_call.1}
  #allocation0 [shape = 'u32[]', space=smem, size = 0x4, offset = 0x4, fixed_abs, tag = 'smem constant byte address 0x4 - core index']
  #allocation1 [shape = 'u32[144,128]{1,0:T(1,128)}', space=vmem, size = 0x12000, scoped, tag = 'internal scratch']
  %s0 = inlined_call_operand.hbm [shape: f32[16,32], index: 0, kind: input, shape index: {}]
  %s1 = inlined_call_operand.hbm [shape: bf16[32,96], index: 1, kind: input, shape index: {}]
  %s2 = inlined_call_operand.vmem [shape: f32[1,96], index: 2, kind: input, shape index: {}]
  %s3 = inlined_call_operand.hbm [shape: bf16[16,96], index: 3, kind: output, shape index: {}]
  %s4 = sld [smem:[#allocation0]]
  $region53: #{tpu_custom_call.1} parent=0
    _
  %s6 = ssub.s32 1, %s4
  %s7 = scalar_select 0, %s6, %s4
  $region1: #{tpu_custom_call.1} parent=0
    #allocation2 [shape = 'u8[8192]{0}', space=vmem, size = 0x2000, scoped, tag = 'input window, operand 0']
    #allocation3 [shape = 's32[2]{0}', space=sflag, size = 0x8, scoped, tag = 'scoped memory for tpu_custom_call.1']
    #allocation4 [shape = 's32[2]{0}', space=sflag, size = 0x8, scoped, tag = 'scoped memory for tpu_custom_call.1']
    #allocation5 [shape = 'u8[8192]{0}', space=vmem, size = 0x2000, scoped, tag = 'input window, operand 1, single buffered']
    #allocation6 [shape = 's32[1]{0}', space=sflag, size = 0x4, scoped, tag = 'scoped memory for tpu_custom_call.1']
    #allocation7 [shape = 'u8[4096]{0}', space=vmem, size = 0x1000, scoped, tag = 'output window, operand 0']
    %8 = vsyncpa [#allocation3], 0
    %s9 = scalar_lea.sflag [#allocation3], 1
    %10 = vsyncpa %s9, 0
    %11 = vsyncpa [#allocation6], 0
    %12 = vsyncpa [#allocation4], 0
    %s13 = scalar_lea.sflag [#allocation4], 1
    %14 = vsyncpa %s13, 0
    loop: start=0, step=1, limit=4
    $region2: #{tpu_custom_call.1} parent=1 // loop_pre_header
      _
    $region3: #{tpu_custom_call.1} parent=1 // loop_header
      %s16 = sphi 0, %s20
      %p17 = scmp.ge.s32.totalorder %s16, 4
      %s23 = sphi 0, %s35
      %s24 = sphi 0, %s31
      %s25 = sphi 0, %s23
      %s26 = sphi 0, %s24
      %s27 = sphi 0, %s25
      %s28 = sphi 0, %s26
      %s38 = sphi 0, %s40
      %s41 = sphi 0, %s38
      %s42 = sphi 0, %s41
      %s58 = sphi 0, %s42
      %s64 = sphi 0, %s66
      %s67 = sphi 0, %s64
      %s68 = sphi 0, %s67
      %s84 = sphi 0, %s68
      %s90 = sphi 0, %s92
      %s93 = sphi 0, %s90
      %s94 = sphi 0, %s93
      %s110 = sphi 0, %s94
      %s118 = sphi 0, %s120
      %s121 = sphi 0, %s118
      %s122 = sphi 0, %s121
      %s138 = sphi 0, %s122
    $region4: #{tpu_custom_call.1} parent=1 // loop_header_branch
      %19 = sbr.rel (%p17) target = $region8
    $region5: #{tpu_custom_call.1} parent=1 // loop_body
      %s21 = ssub.s32 %s16, 1
      %s22 = ssub.s32 %s16, 2
      %s29 = sadd.s32 1, %s24
      %p30 = scmp.ge.s32.totalorder %s29, 1
      %s31 = scalar_select %p30, 0, %s29
      %s32 = sadd.s32 1, %s23
      %s33 = scalar_select %p30, %s32, %s23
      %p34 = scmp.ge.s32.totalorder %s33, 2
      %s35 = scalar_select %p34, 0, %s33
      %s36 = ssub.s32 %s23, %s35
      %p37 = scmp.eq.s32.totalorder %s36, 0
      %s39 = sadd.s32 %s38, 1
      %s40 = scalar_select %p37, %s38, %s39
      %p43 = pneg %p37
      %p44 = scmp.eq.s32.totalorder %s16, 1
      %p45 = por %p43, %p44
      %p46 = scmp.ne.s32.totalorder %s38, %s41
      %p47 = scmp.eq.s32.totalorder %s16, 0
      %p48 = por %p46, %p47
      %p49 = scmp.ne.s32.totalorder %s38, %s41
      %p50 = scmp.eq.s32.totalorder %s21, 1
      %p51 = por %p49, %p50
      %p52 = scmp.ne.s32.totalorder %s41, %s42
      %p53 = scmp.eq.s32.totalorder %s21, 0
      %p54 = por %p52, %p53
      %p55 = scmp.ne.s32.totalorder %s41, %s42
      %p56 = scmp.eq.s32.totalorder %s22, 1
      %p57 = por %p55, %p56
      %p59 = scmp.ne.s32.totalorder %s42, %s58
      %p60 = scmp.eq.s32.totalorder %s22, 0
      %p61 = por %p59, %p60
      %s62 = ssub.s32 %s24, %s31
      %p63 = scmp.eq.s32.totalorder %s62, 0
      %s65 = sadd.s32 %s64, 1
      %s66 = scalar_select %p63, %s64, %s65
      %p69 = pneg %p63
      %p70 = scmp.eq.s32.totalorder %s16, 1
      %p71 = por %p69, %p70
      %p72 = scmp.ne.s32.totalorder %s64, %s67
      %p73 = scmp.eq.s32.totalorder %s16, 0
      %p74 = por %p72, %p73
      %p75 = scmp.ne.s32.totalorder %s64, %s67
      %p76 = scmp.eq.s32.totalorder %s21, 1
      %p77 = por %p75, %p76
      %p78 = scmp.ne.s32.totalorder %s67, %s68
      %p79 = scmp.eq.s32.totalorder %s21, 0
      %p80 = por %p78, %p79
      %p81 = scmp.ne.s32.totalorder %s67, %s68
      %p82 = scmp.eq.s32.totalorder %s22, 1
      %p83 = por %p81, %p82
      %p85 = scmp.ne.s32.totalorder %s68, %s84
      %p86 = scmp.eq.s32.totalorder %s22, 0
      %p87 = por %p85, %p86
      %s88 = ssub.s32 %s24, %s31
      %p89 = scmp.eq.s32.totalorder %s88, 0
      %s91 = sadd.s32 %s90, 1
      %s92 = scalar_select %p89, %s90, %s91
      %p95 = pneg %p89
      %p96 = scmp.eq.s32.totalorder %s16, 1
      %p97 = por %p95, %p96
      %p98 = scmp.ne.s32.totalorder %s90, %s93
      %p99 = scmp.eq.s32.totalorder %s16, 0
      %p100 = por %p98, %p99
      %p101 = scmp.ne.s32.totalorder %s90, %s93
      %p102 = scmp.eq.s32.totalorder %s21, 1
      %p103 = por %p101, %p102
      %p104 = scmp.ne.s32.totalorder %s93, %s94
      %p105 = scmp.eq.s32.totalorder %s21, 0
      %p106 = por %p104, %p105
      %p107 = scmp.ne.s32.totalorder %s93, %s94
      %p108 = scmp.eq.s32.totalorder %s22, 1
      %p109 = por %p107, %p108
      %p111 = scmp.ne.s32.totalorder %s94, %s110
      %p112 = scmp.eq.s32.totalorder %s22, 0
      %p113 = por %p111, %p112
      %s114 = ssub.s32 %s23, %s35
      %s115 = ssub.s32 %s24, %s31
      %s116 = sor.u32 %s114, %s115
      %p117 = scmp.eq.s32.totalorder %s116, 0
      %s119 = sadd.s32 %s118, 1
      %s120 = scalar_select %p117, %s118, %s119
      %p123 = pneg %p117
      %p124 = scmp.eq.s32.totalorder %s16, 1
      %p125 = por %p123, %p124
      %p126 = scmp.ne.s32.totalorder %s118, %s121
      %p127 = scmp.eq.s32.totalorder %s16, 0
      %p128 = por %p126, %p127
      %p129 = scmp.ne.s32.totalorder %s118, %s121
      %p130 = scmp.eq.s32.totalorder %s21, 1
      %p131 = por %p129, %p130
      %p132 = scmp.ne.s32.totalorder %s121, %s122
      %p133 = scmp.eq.s32.totalorder %s21, 0
      %p134 = por %p132, %p133
      %p135 = scmp.ne.s32.totalorder %s121, %s122
      %p136 = scmp.eq.s32.totalorder %s22, 1
      %p137 = por %p135, %p136
      %p139 = scmp.ne.s32.totalorder %s122, %s138
      %p140 = scmp.eq.s32.totalorder %s22, 0
      %p141 = por %p139, %p140
      %p142 = scmp.le.s32.totalorder 1, %s16
      %p143 = scmp.lt.s32.totalorder %s16, 3
      %p144 = pnand %p142, %p143
      %p145 = pneg %p144
      // Predicated region
      $region9: #{tpu_custom_call.1} parent=5 // pred_check
        _
      $region10: #{tpu_custom_call.1} parent=5 // pred_check_branch
        %147 = sbr.rel (%p144) target = $region12
      $region11: #{tpu_custom_call.1} parent=5 // pred_region
        %s148 = ssub.s32 %s16, 1
        // Predicated region
        $region13: #{tpu_custom_call.1} parent=11 // pred_check
          %p149 = pneg %p80
        $region14: #{tpu_custom_call.1} parent=11 // pred_check_branch
          %151 = sbr.rel (%p149) target = $region16
        $region15: #{tpu_custom_call.1} parent=11 // pred_region
          %s153 = ssub.s32 256, 256
          %154 = vsyncadd [#allocation6], %s153
          %s155 = smul.addr %s26, 64
          %s156 = scalar_lea.hbm %s1, %s155
          %s157 = sshll.u32 [#allocation5], 4
          %s158 = int_to_ptr.vmem [resolvable:$true] %s157
          %163 = dma.hbm_to_vmem [thread:$0]  %s156, 256, %s158, [#allocation6], 64, 64, 4
        $region16: #{tpu_custom_call.1} parent=11 // pred_fallthru
          _
        // Predicated region
        $region17: #{tpu_custom_call.1} parent=11 // pred_check
          %p164 = pneg %p106
        $region18: #{tpu_custom_call.1} parent=11 // pred_check_branch
          %166 = sbr.rel (%p164) target = $region20
        $region19: #{tpu_custom_call.1} parent=11 // pred_region
          %p167 = scmp.lt.s32.totalorder %s26, 0
          %s168 = scalar_select %p167, %s26, 0
          %s169 = scalar_lea.vmem %s2, %s168
        $region20: #{tpu_custom_call.1} parent=11 // pred_fallthru
          _
      $region12: #{tpu_custom_call.1} parent=5 // pred_fallthru
        _
      %p170 = scmp.lt.s32.totalorder %s16, 2
      // Predicated region
      $region21: #{tpu_custom_call.1} parent=5 // pred_check
        %p171 = pneg %p170
      $region22: #{tpu_custom_call.1} parent=5 // pred_check_branch
        %173 = sbr.rel (%p171) target = $region24
      $region23: #{tpu_custom_call.1} parent=5 // pred_region
        // Predicated region
        $region25: #{tpu_custom_call.1} parent=23 // pred_check
          %p174 = pneg %p48
        $region26: #{tpu_custom_call.1} parent=23 // pred_check_branch
          %176 = sbr.rel (%p174) target = $region28
        $region27: #{tpu_custom_call.1} parent=23 // pred_region
          %s177 = sand.u32 %s38, 1
          %s178 = scalar_lea.sflag [#allocation3], %s177
          %s179 = sand.u32 %s38, 1
          %s180 = smul.addr %s179, 8
          %s181 = scalar_lea.vmem [#allocation2], %s180
          %s183 = ssub.s32 128, 128
          %184 = vsyncadd %s178, %s183
          %s185 = smul.addr %s23, 128
          %s186 = scalar_lea.hbm %s0, %s185
          %s188 = sshll.u32 %s181, 4
          %s189 = int_to_ptr.vmem [resolvable:$true] %s188
          %191 = dma.hbm_to_vmem [thread:$0]  %s186, 128, %s189, %s178
        $region28: #{tpu_custom_call.1} parent=23 // pred_fallthru
          _
      $region24: #{tpu_custom_call.1} parent=5 // pred_fallthru
        _
      %p192 = scmp.le.s32.totalorder 1, %s16
      %p193 = scmp.lt.s32.totalorder %s16, 3
      %p194 = pnand %p192, %p193
      %p195 = pneg %p194
      // Predicated region
      $region29: #{tpu_custom_call.1} parent=5 // pred_check
        _
      $region30: #{tpu_custom_call.1} parent=5 // pred_check_branch
        %197 = sbr.rel (%p194) target = $region32
      $region31: #{tpu_custom_call.1} parent=5 // pred_region
        %s198 = ssub.s32 %s16, 1
        %s199 = sand.u32 %s41, 1
        %s200 = scalar_lea.sflag [#allocation3], %s199
        %s201 = sand.u32 %s41, 1
        %s202 = smul.addr %s201, 8
        %s203 = scalar_lea.vmem [#allocation2], %s202
        // Predicated region
        $region33: #{tpu_custom_call.1} parent=31 // pred_check
          %p204 = pneg %p54
        $region34: #{tpu_custom_call.1} parent=31 // pred_check_branch
          %206 = sbr.rel (%p204) target = $region36
        $region35: #{tpu_custom_call.1} parent=31 // pred_region
          %207 = dma.done %s200, 128
        $region36: #{tpu_custom_call.1} parent=31 // pred_fallthru
          _
        // Predicated region
        $region37: #{tpu_custom_call.1} parent=31 // pred_check
          %p208 = pneg %p80
        $region38: #{tpu_custom_call.1} parent=31 // pred_check_branch
          %210 = sbr.rel (%p208) target = $region40
        $region39: #{tpu_custom_call.1} parent=31 // pred_region
          %211 = dma.done [#allocation6], 256
        $region40: #{tpu_custom_call.1} parent=31 // pred_fallthru
          _
        %s212 = sand.u32 %s41, 1
        %s213 = scalar_lea.sflag [#allocation3], %s212
        %s214 = sand.u32 %s41, 1
        %s215 = smul.addr %s214, 8
        %s216 = scalar_lea.vmem [#allocation2], %s215
        %p217 = pneg %p54
        %p218 = pneg %p51
        %p219 = pneg %p80
        %p220 = pneg %p77
        %p221 = scmp.lt.s32.totalorder %s26, 0
        %s222 = scalar_select %p221, %s26, 0
        %s223 = scalar_lea.vmem %s2, %s222
        %p224 = pneg %p106
        %p225 = pneg %p103
        %p226 = pneg %p134
        %p227 = pneg %p131
        %s228 = sand.u32 %s121, 1
        %s229 = scalar_lea.sflag [#allocation4], %s228
        %s230 = sand.u32 %s121, 1
        %s231 = smul.addr %s230, 4
        %s232 = scalar_lea.vmem [#allocation7], %s231
        %p233 = scmp.lt.s32.totalorder %s26, 0
        %s234 = scalar_select %p233, %s26, 0
        %s235 = scalar_lea.vmem %s2, %s234
        %v237 = vld [vmem:[%s203] sm:$0xff]
        %v238 = vpack.c.bf16 %v237, %v237
        %v239 = vld [vmem:[#allocation5] sm:$0xf]
        %v240 = vld [vmem:[#allocation5 + $0x4] sm:$0xf]
        %v241 = vld [vmem:[#allocation5 + $0x8] sm:$0xf]
        %v242 = vld [vmem:[#allocation5 + $0xc] sm:$0xf]
        %v243 = vld [vmem:[%s235] sm:$0x1]
        %v245 = vlaneseq
        %v246 = vshrl.u32 %v245, 7
        %v247 = vsub.s32 0, %v246
        %v248 = vrot.slane %v243, %v247
        %v254 = vunpack.c.l.b16 %v239
        %v255 = vunpack.c.l.b16 %v240
        %v256 = vunpack.c.l.b16 %v241
        %v257 = vunpack.c.l.b16 %v242
        %v258 = vpack.c.b16 %v255, %v254
        %v259 = vpack.c.b16 %v257, %v256
        %vm262 = vcmask 261120
        %v264 = vsel %vm262, %v238, 0
        %266 = vmatprep.subr.bf16.mxu0 0
        %267 = vmatpush1.bf16.msra.mxu0 0
        %268 = vmatprep.subr.bf16.mxu0 0
        %269 = vmatpush1.bf16.msra.mxu0 0
        %270 = vmatprep.subr.bf16.mxu0 0
        %271 = vmatpush1.bf16.msra.mxu0 0
        %272 = vmatprep.subr.bf16.mxu0 0
        %273 = vmatpush1.bf16.msra.mxu0 0
        %274 = vmatprep.subr.bf16.mxu0 0
        %275 = vmatpush1.bf16.msra.mxu0 0
        %276 = vmatprep.subr.bf16.mxu0 0
        %277 = vmatpush1.bf16.msra.mxu0 0
        %278 = vmatprep.subr.bf16.mxu0 0
        %279 = vmatpush1.bf16.msra.mxu0 %v259
        %280 = vmatprep.subr.bf16.mxu0 0
        %281 = vmatpush1.bf16.msra.mxu0 %v258
        %282 = vmatprep.subr.bf16.mxu0 0
        %283 = vmatpush2.bf16.msra.mxu0 0
        %284 = vmatprep.subr.bf16.mxu0 0
        %285 = vmatpush2.bf16.msra.mxu0 0
        %286 = vmatprep.subr.bf16.mxu0 0
        %287 = vmatpush2.bf16.msra.mxu0 0
        %288 = vmatprep.subr.bf16.mxu0 0
        %289 = vmatpush2.bf16.msra.mxu0 0
        %290 = vmatprep.subr.bf16.mxu0 0
        %291 = vmatpush2.bf16.msra.mxu0 0
        %292 = vmatprep.subr.bf16.mxu0 0
        %293 = vmatpush2.bf16.msra.mxu0 0
        %294 = vmatprep.subr.bf16.mxu0 0
        %295 = vmatpush2.bf16.msra.mxu0 0
        %296 = vmatprep.subr.bf16.mxu0 0
        %297 = vmatpush2.bf16.msra.mxu0 0
        %298 = vmatprep.mubr.bf16.mxu0 0
        %299 = vmatmul.mubr.bf16.gmra.mxu0 %v264
        %v300 = vpop.f32.mrf.mxu0
        %v301 = vadd.f32 %v248, %v300
        %v302 = vpop.f32.mrf.mxu0
        %v303 = vpop.f32.mrf.mxu0
        %v304 = vpop.f32.mrf.mxu0
        %305 = vdwg.mxu0
        %v306 = vpack.c.bf16 %v301, %v301
        %vm307 = vcmask 781312
        %308 = vst.msk [vmem:[%s232] sm:$0xf] %vm307, %v306
        %s309 = sand.u32 %s121, 1
        %s310 = scalar_lea.sflag [#allocation4], %s309
        %s311 = sand.u32 %s121, 1
        %s312 = smul.addr %s311, 4
        %s313 = scalar_lea.vmem [#allocation7], %s312
        // Predicated region
        $region41: #{tpu_custom_call.1} parent=31 // pred_check
          %p314 = pneg %p131
        $region42: #{tpu_custom_call.1} parent=31 // pred_check_branch
          %316 = sbr.rel (%p314) target = $region44
        $region43: #{tpu_custom_call.1} parent=31 // pred_region
          %s318 = ssub.s32 64, 64
          %319 = vsyncadd %s310, %s318
          %s320 = sadd.s32 %s26, %s25
          %s321 = smul.addr %s320, 64
          %s322 = scalar_lea.hbm %s3, %s321
          %s324 = sshll.u32 %s313, 4
          %s325 = int_to_ptr.vmem [resolvable:$true] %s324
          %327 = dma.vmem_to_hbm [thread:$0]  %s325, 64, %s322, %s310
        $region44: #{tpu_custom_call.1} parent=31 // pred_fallthru
          _
      $region32: #{tpu_custom_call.1} parent=5 // pred_fallthru
        _
      %p328 = scmp.le.s32.totalorder 2, %s16
      // Predicated region
      $region45: #{tpu_custom_call.1} parent=5 // pred_check
        %p329 = pneg %p328
      $region46: #{tpu_custom_call.1} parent=5 // pred_check_branch
        %331 = sbr.rel (%p329) target = $region48
      $region47: #{tpu_custom_call.1} parent=5 // pred_region
        %s332 = ssub.s32 %s16, 2
        // Predicated region
        $region49: #{tpu_custom_call.1} parent=47 // pred_check
          %p333 = pneg %p137
        $region50: #{tpu_custom_call.1} parent=47 // pred_check_branch
          %335 = sbr.rel (%p333) target = $region52
        $region51: #{tpu_custom_call.1} parent=47 // pred_region
          %s336 = sand.u32 %s122, 1
          %s337 = scalar_lea.sflag [#allocation4], %s336
          %s338 = sand.u32 %s122, 1
          %s339 = smul.addr %s338, 4
          %s340 = scalar_lea.vmem [#allocation7], %s339
          %341 = dma.done %s337, 64
        $region52: #{tpu_custom_call.1} parent=47 // pred_fallthru
          _
      $region48: #{tpu_custom_call.1} parent=5 // pred_fallthru
        _
    $region6: #{tpu_custom_call.1} parent=1 // loop_footer
      %s20 = sadd.s32 1, %s16
    $region7: #{tpu_custom_call.1} parent=1 // loop_footer_branch
      %15 = sbr.rel target = $region3
    $region8: #{tpu_custom_call.1} parent=1 // loop_exit
      _
    %342 = vsyncpa [#allocation3], 1
    %s343 = scalar_lea.sflag [#allocation3], 1
    %344 = vsyncpa %s343, 1
    %345 = vsyncpa [#allocation6], 1
    %346 = vsyncpa [#allocation4], 1
    %s347 = scalar_lea.sflag [#allocation4], 1
    %348 = vsyncpa %s347, 1

</llo_original>
